<compile_context>
chip_gen: v7x
topology: tpu7x:2x2x1
jax: 0.10.0
libtpu: 0.0.40
codegen_flags: <defaults>
</compile_context>

<pallas_src>
import jax
import jax.numpy as jnp
from jax.experimental import pallas as pl
from jax.experimental.pallas import tpu as pltpu


def _make_kqv_kernel(dot_dtype):
    def _kqv_kernel(k_ref, q_ref, v_ref,
                    wa_ref, wb_ref, wg_ref, bkq_ref, bg_ref,
                    o_ref):
        # alpha(k) + beta(q); both biases pre-folded into one (Cout, 1) bias.
        k = k_ref[...].astype(dot_dtype)
        q = q_ref[...].astype(dot_dtype)
        kq_lin = (
            jnp.dot(wa_ref[...], k, preferred_element_type=jnp.float32)
            + jnp.dot(wb_ref[...], q, preferred_element_type=jnp.float32)
            + bkq_ref[...]
        )
        kq = jax.nn.sigmoid(kq_lin)

        # Single load of the v tile, reused for gamma(v) and the residual add.
        v = v_ref[...]
        gv = (jnp.dot(wg_ref[...], v.astype(dot_dtype),
                      preferred_element_type=jnp.float32)
              + bg_ref[...])
        o_ref[...] = (v.astype(jnp.float32) + gv * kq).astype(o_ref.dtype)

    return _kqv_kernel


def _round_up(x, m):
    return (x + m - 1) // m * m


def _pick_tile_s(s, n, cin, cq, cout, itemsize, target_bytes=4 << 20):
    """Lane-dense spatial tile sized so each grid step moves ~target_bytes of HBM."""
    per_lane = (cin + cq + 2 * cout) * itemsize       # HBM bytes per spatial lane
    tile = max(128, min(target_bytes // per_lane, 32768))
    tile = (tile // 128) * 128
    tile = min(tile, _round_up(s, 128))               # never wider than the extent
    # Keep >= ~8 total grid steps so both v7x TensorCores get work and
    # double-buffering still has steps to pipeline (irrelevant on v5e/v6e).
    while tile > 128 and n * pl.cdiv(s, tile) < 8:
        tile = max(128, (tile // 2 // 128) * 128)
    return tile


def _vmem_limit_bytes(tile_s, cin, cq, cout, itemsize):
    """Budget: double-buffered k/q/v/out tiles (sublane-padded) + f32 temps + weights."""
    sub = 8 if itemsize >= 4 else 16
    act_rows = (_round_up(cin, sub) + _round_up(cq, sub)
                + 2 * _round_up(cout, sub))           # k, q, v, out
    dbuf = 2 * act_rows * tile_s * itemsize           # double-buffered pipeline tiles
    tmp = 4 * _round_up(cout, 8) * tile_s * 4         # f32 kq_lin / kq / gv / v_f32
    wts = 2 * _round_up(cout, 8) * (_round_up(cin, 128) + _round_up(cq, 128)
                                    + _round_up(cout, 128) + 2 * 128) * 4
    budget = int((dbuf + tmp + wts) * 1.25) + (2 << 20)
    # Floor at 32 MiB (>= every generation's scoped default we need), cap at
    # 48 MiB to leave headroom under v7x's 64 MiB physical VMEM.
    return min(max(budget, 32 << 20), 48 << 20)


def kqv_unit_pallas(k, q, v, params, *, tile_s=None, dot_dtype=jnp.bfloat16,
                    q_buffers=2):
    """k: (N, Cin, D, H, W), q: (N, 4*Cin, D, H, W), v: (N, Cout, D, H, W)."""
    wa, ba, wb, bb, wg, bg = params
    n, cin, d, h, w = k.shape
    cq = q.shape[1]
    cout = v.shape[1]
    s = d * h * w
    itemsize = jnp.dtype(k.dtype).itemsize

    # NCDHW -> (N, C, S): pure reshape, zero data movement. No pad / slice:
    # Pallas masks the ragged final spatial block (safe: no cross-lane reduce).
    k2 = k.reshape(n, cin, s)
    q2 = q.reshape(n, cq, s)
    v2 = v.reshape(n, cout, s)

    if tile_s is None:
        tile_s = _pick_tile_s(s, n, cin, cq, cout, itemsize)
    else:
        tile_s = max(128, min((tile_s // 128) * 128, _round_up(s, 128)))

    grid = (n, pl.cdiv(s, tile_s))

    # Weights cast once (tiny) to the dot compute dtype; biases folded, kept f32.
    wa_c = wa.astype(dot_dtype)
    wb_c = wb.astype(dot_dtype)
    wg_c = wg.astype(dot_dtype)
    b_kq = (ba.astype(jnp.float32) + bb.astype(jnp.float32)).reshape(cout, 1)
    b_g = bg.astype(jnp.float32).reshape(cout, 1)

    def spatial_spec(c, buffers=2):
        if buffers != 2:
            return pl.BlockSpec((None, c, tile_s), lambda ni, si: (ni, 0, si),
                                pipeline_mode=pl.Buffered(buffers))
        return pl.BlockSpec((None, c, tile_s), lambda ni, si: (ni, 0, si))

    def full_spec(r, c):
        return pl.BlockSpec((r, c), lambda ni, si: (0, 0))

    m_total = n * s
    cost = pl.CostEstimate(
        flops=2 * m_total * (cin + cq + cout) * cout,
        transcendentals=m_total * cout,
        bytes_accessed=m_total * (cin + cq + 2 * cout) * itemsize,
    )

    out2 = pl.pallas_call(
        _make_kqv_kernel(dot_dtype),
        out_shape=jax.ShapeDtypeStruct((n, cout, s), v.dtype),
        grid_spec=pltpu.PrefetchScalarGridSpec(
            num_scalar_prefetch=0,
            grid=grid,
            in_specs=[
                spatial_spec(cin),               # k  (Cin,   tile_s)
                spatial_spec(cq, q_buffers),     # q  (4*Cin, tile_s)
                spatial_spec(cout),              # v  (Cout,  tile_s)
                full_spec(cout, cin),            # alpha weight (Cout, Cin)
                full_spec(cout, cq),             # beta  weight (Cout, 4*Cin)
                full_spec(cout, cout),           # gamma weight (Cout, Cout)
                full_spec(cout, 1),              # folded alpha+beta bias
                full_spec(cout, 1),              # gamma bias
            ],
            out_specs=spatial_spec(cout),
        ),
        compiler_params=pltpu.CompilerParams(
            dimension_semantics=("parallel", "parallel"),
            vmem_limit_bytes=_vmem_limit_bytes(tile_s, cin, cq, cout, itemsize)),
        cost_estimate=cost,
    )(k2, q2, v2, wa_c, wb_c, wg_c, b_kq, b_g)

    return out2.reshape(n, cout, d, h, w)


def init_params(key, in_channels, out_channels, dtype=jnp.float32):
    """Synthetic conv1x1x1 parameters. Weights stored PyTorch-style (Cout, Cin)."""
    ks = jax.random.split(key, 6)
    wa = jax.random.normal(ks[0], (out_channels, in_channels), dtype) * 0.1
    ba = jax.random.normal(ks[1], (out_channels,), dtype) * 0.1
    wb = jax.random.normal(ks[2], (out_channels, in_channels * 4), dtype) * 0.1
    bb = jax.random.normal(ks[3], (out_channels,), dtype) * 0.1
    wg = jax.random.normal(ks[4], (out_channels, out_channels), dtype) * 0.1
    bg = jax.random.normal(ks[5], (out_channels,), dtype) * 0.1
    return (wa, ba, wb, bb, wg, bg)


def kqv_unit_ref(k, q, v, params):
    """Pure-JAX reference reproducing the PyTorch forward exactly."""
    wa, ba, wb, bb, wg, bg = params

    def conv1x1x1(x, w, b):
        y = jnp.einsum('ncdhw,oc->nodhw', x, w)
        return y + b[None, :, None, None, None]

    kk = conv1x1x1(k, wa, ba)
    qq = conv1x1x1(q, wb, bb)
    kq = jax.nn.sigmoid(kk + qq)
    return v + conv1x1x1(v, wg, bg) * kq


if __name__ == "__main__":
    key = jax.random.PRNGKey(0)
    in_channels, out_channels = 4, 8
    N, D, H, W = 2, 8, 8, 8   # S = 512 voxels per sample

    pkey, kk_, kq_, kv_ = jax.random.split(key, 4)
    params = init_params(pkey, in_channels, out_channels)

    k = jax.random.normal(kk_, (N, in_channels, D, H, W), jnp.float32)
    q = jax.random.normal(kq_, (N, in_channels * 4, D, H, W), jnp.float32)
    v = jax.random.normal(kv_, (N, out_channels, D, H, W), jnp.float32)

    ref = kqv_unit_ref(k, q, v, params)

    # Exact path: f32 dots, tight tolerance.
    out_f32 = jax.block_until_ready(
        kqv_unit_pallas(k, q, v, params, dot_dtype=jnp.float32))
    assert out_f32.shape == ref.shape == (N, out_channels, D, H, W)
    assert jnp.allclose(out_f32, ref, atol=1e-4, rtol=1e-4), "f32-path mismatch"

    # Default fast path: bf16 MXU dots with f32 accumulation.
    out_bf16 = jax.block_until_ready(kqv_unit_pallas(k, q, v, params))
    assert jnp.allclose(out_bf16, ref, atol=2e-2, rtol=2e-2), "bf16-path mismatch"

    # Ragged spatial extent (S = 315, not a multiple of 128) exercises the
    # masked final block path (no HBM pad / slice).
    D2, H2, W2 = 5, 7, 9
    k3 = jax.random.normal(kk_, (N, in_channels, D2, H2, W2), jnp.float32)
    q3 = jax.random.normal(kq_, (N, in_channels * 4, D2, H2, W2), jnp.float32)
    v3 = jax.random.normal(kv_, (N, out_channels, D2, H2, W2), jnp.float32)
    out3 = jax.block_until_ready(
        kqv_unit_pallas(k3, q3, v3, params, dot_dtype=jnp.float32))
    ref3 = kqv_unit_ref(k3, q3, v3, params)
    assert jnp.allclose(out3, ref3, atol=1e-4, rtol=1e-4), "ragged-path mismatch"

    print("KERNEL_OK")
</pallas_src>

<mosaic_0001>
module attributes {stable_mosaic.version = 11 : i64} {
  func.func @_kqv_kernel(%arg0: i32, %arg1: i32, %arg2: memref<1x4x128xf32, #tpu.memory_space<vmem>>, %arg3: memref<1x16x128xf32, #tpu.memory_space<vmem>>, %arg4: memref<1x8x128xf32, #tpu.memory_space<vmem>>, %arg5: memref<8x4xf32, #tpu.memory_space<vmem>>, %arg6: memref<8x16xf32, #tpu.memory_space<vmem>>, %arg7: memref<8x8xf32, #tpu.memory_space<vmem>>, %arg8: memref<8x1xf32, #tpu.memory_space<vmem>>, %arg9: memref<8x1xf32, #tpu.memory_space<vmem>>, %arg10: memref<1x8x128xf32, #tpu.memory_space<vmem>>) attributes {dimension_semantics = [#tpu.dimension_semantics<parallel>, #tpu.dimension_semantics<parallel>], iteration_bounds = array<i64: 2, 4>, scalar_prefetch = 0 : i64, scratch_operands = 0 : i64, tpu.core_type = #tpu.core_type<tc>, window_params = [{transform_indices = @transform_0, window_bounds = array<i64: 1, 4, 128>}, {transform_indices = @transform_1, window_bounds = array<i64: 1, 16, 128>}, {transform_indices = @transform_2, window_bounds = array<i64: 1, 8, 128>}, {pipeline_mode = #tpu.pipeline_mode<synchronous>, transform_indices = @transform_3, window_bounds = array<i64: 8, 4>}, {pipeline_mode = #tpu.pipeline_mode<synchronous>, transform_indices = @transform_4, window_bounds = array<i64: 8, 16>}, {pipeline_mode = #tpu.pipeline_mode<synchronous>, transform_indices = @transform_5, window_bounds = array<i64: 8, 8>}, {pipeline_mode = #tpu.pipeline_mode<synchronous>, transform_indices = @transform_6, window_bounds = array<i64: 8, 1>}, {pipeline_mode = #tpu.pipeline_mode<synchronous>, transform_indices = @transform_7, window_bounds = array<i64: 8, 1>}, {transform_indices = @transform_8, window_bounds = array<i64: 1, 8, 128>}]} {
    %c0 = arith.constant 0 : index
    %c0_0 = arith.constant 0 : index
    %c0_1 = arith.constant 0 : index
    %0 = vector.load %arg2[%c0, %c0_0, %c0_1] : memref<1x4x128xf32, #tpu.memory_space<vmem>>, vector<1x4x128xf32>
    %1 = vector.shape_cast %0 : vector<1x4x128xf32> to vector<4x128xf32>
    %c0_2 = arith.constant 0 : index
    %c0_3 = arith.constant 0 : index
    %c0_4 = arith.constant 0 : index
    %2 = vector.load %arg3[%c0_2, %c0_3, %c0_4] : memref<1x16x128xf32, #tpu.memory_space<vmem>>, vector<1x16x128xf32>
    %3 = vector.shape_cast %2 : vector<1x16x128xf32> to vector<16x128xf32>
    %c0_5 = arith.constant 0 : index
    %c0_6 = arith.constant 0 : index
    %4 = vector.load %arg5[%c0_5, %c0_6] : memref<8x4xf32, #tpu.memory_space<vmem>>, vector<8x4xf32>
    %cst = arith.constant dense<0.000000e+00> : vector<8x128xf32>
    %5 = tpu.matmul %4, %1, %cst {dimension_numbers = #tpu.dot_dimension_numbers<[1], [0], [0], [1], [0, 0, 1, 1], [], []>} : vector<8x4xf32>, vector<4x128xf32>, vector<8x128xf32> -> vector<8x128xf32>
    %c0_7 = arith.constant 0 : index
    %c0_8 = arith.constant 0 : index
    %6 = vector.load %arg6[%c0_7, %c0_8] : memref<8x16xf32, #tpu.memory_space<vmem>>, vector<8x16xf32>
    %cst_9 = arith.constant dense<0.000000e+00> : vector<8x128xf32>
    %7 = tpu.matmul %6, %3, %cst_9 {dimension_numbers = #tpu.dot_dimension_numbers<[1], [0], [0], [1], [0, 0, 1, 1], [], []>} : vector<8x16xf32>, vector<16x128xf32>, vector<8x128xf32> -> vector<8x128xf32>
    %8 = arith.addf %5, %7 : vector<8x128xf32>
    %c0_10 = arith.constant 0 : index
    %c0_11 = arith.constant 0 : index
    %9 = vector.load %arg8[%c0_10, %c0_11] : memref<8x1xf32, #tpu.memory_space<vmem>>, vector<8x1xf32>
    %10 = vector.broadcast %9 : vector<8x1xf32> to vector<8x128xf32>
    %11 = arith.addf %8, %10 : vector<8x128xf32>
    %12 = arith.negf %11 : vector<8x128xf32>
    %13 = math.exp %12 : vector<8x128xf32>
    %cst_12 = arith.constant 1.000000e+00 : f32
    %14 = vector.broadcast %cst_12 : f32 to vector<8x128xf32>
    %15 = arith.addf %14, %13 : vector<8x128xf32>
    %16 = arith.divf %14, %15 : vector<8x128xf32>
    %c0_13 = arith.constant 0 : index
    %c0_14 = arith.constant 0 : index
    %c0_15 = arith.constant 0 : index
    %17 = vector.load %arg4[%c0_13, %c0_14, %c0_15] : memref<1x8x128xf32, #tpu.memory_space<vmem>>, vector<1x8x128xf32>
    %18 = vector.shape_cast %17 : vector<1x8x128xf32> to vector<8x128xf32>
    %c0_16 = arith.constant 0 : index
    %c0_17 = arith.constant 0 : index
    %19 = vector.load %arg7[%c0_16, %c0_17] : memref<8x8xf32, #tpu.memory_space<vmem>>, vector<8x8xf32>
    %cst_18 = arith.constant dense<0.000000e+00> : vector<8x128xf32>
    %20 = tpu.matmul %19, %18, %cst_18 {dimension_numbers = #tpu.dot_dimension_numbers<[1], [0], [0], [1], [0, 0, 1, 1], [], []>} : vector<8x8xf32>, vector<8x128xf32>, vector<8x128xf32> -> vector<8x128xf32>
    %c0_19 = arith.constant 0 : index
    %c0_20 = arith.constant 0 : index
    %21 = vector.load %arg9[%c0_19, %c0_20] : memref<8x1xf32, #tpu.memory_space<vmem>>, vector<8x1xf32>
    %22 = vector.broadcast %21 : vector<8x1xf32> to vector<8x128xf32>
    %23 = arith.addf %20, %22 : vector<8x128xf32>
    %24 = arith.mulf %23, %16 : vector<8x128xf32>
    %25 = arith.addf %18, %24 : vector<8x128xf32>
    %c0_21 = arith.constant 0 : index
    %c0_22 = arith.constant 0 : index
    %c0_23 = arith.constant 0 : index
    %26 = vector.load %arg10[%c0_21, %c0_22, %c0_23] : memref<1x8x128xf32, #tpu.memory_space<vmem>>, vector<1x8x128xf32>
    %27 = vector.shape_cast %26 : vector<1x8x128xf32> to vector<8x128xf32>
    %28 = vector.shape_cast %25 : vector<8x128xf32> to vector<1x8x128xf32>
    tpu.vector_store %arg10[%c0_21, %c0_22, %c0_23], %28 {strides = array<i32>} : memref<1x8x128xf32, #tpu.memory_space<vmem>>, vector<1x8x128xf32>,
    return
  }
  func.func @transform_0(%arg0: i32, %arg1: i32) -> (i32, i32, i32) {
    %c0_i32 = arith.constant 0 : i32
    %c0_i32_0 = arith.constant 0 : i32
    return %arg0, %c0_i32, %arg1 : i32, i32, i32
  }
  func.func @transform_1(%arg0: i32, %arg1: i32) -> (i32, i32, i32) {
    %c0_i32 = arith.constant 0 : i32
    %c0_i32_0 = arith.constant 0 : i32
    return %arg0, %c0_i32, %arg1 : i32, i32, i32
  }
  func.func @transform_2(%arg0: i32, %arg1: i32) -> (i32, i32, i32) {
    %c0_i32 = arith.constant 0 : i32
    %c0_i32_0 = arith.constant 0 : i32
    return %arg0, %c0_i32, %arg1 : i32, i32, i32
  }
  func.func @transform_3(%arg0: i32, %arg1: i32) -> (i32, i32) {
    %c0_i32 = arith.constant 0 : i32
    %c0_i32_0 = arith.constant 0 : i32
    %c0_i32_1 = arith.constant 0 : i32
    return %c0_i32, %c0_i32_0 : i32, i32
  }
  func.func @transform_4(%arg0: i32, %arg1: i32) -> (i32, i32) {
    %c0_i32 = arith.constant 0 : i32
    %c0_i32_0 = arith.constant 0 : i32
    %c0_i32_1 = arith.constant 0 : i32
    return %c0_i32, %c0_i32_0 : i32, i32
  }
  func.func @transform_5(%arg0: i32, %arg1: i32) -> (i32, i32) {
    %c0_i32 = arith.constant 0 : i32
    %c0_i32_0 = arith.constant 0 : i32
    %c0_i32_1 = arith.constant 0 : i32
    return %c0_i32, %c0_i32_0 : i32, i32
  }
  func.func @transform_6(%arg0: i32, %arg1: i32) -> (i32, i32) {
    %c0_i32 = arith.constant 0 : i32
    %c0_i32_0 = arith.constant 0 : i32
    %c0_i32_1 = arith.constant 0 : i32
    return %c0_i32, %c0_i32_0 : i32, i32
  }
  func.func @transform_7(%arg0: i32, %arg1: i32) -> (i32, i32) {
    %c0_i32 = arith.constant 0 : i32
    %c0_i32_0 = arith.constant 0 : i32
    %c0_i32_1 = arith.constant 0 : i32
    return %c0_i32, %c0_i32_0 : i32, i32
  }
  func.func @transform_8(%arg0: i32, %arg1: i32) -> (i32, i32, i32) {
    %c0_i32 = arith.constant 0 : i32
    %c0_i32_0 = arith.constant 0 : i32
    return %arg0, %c0_i32, %arg1 : i32, i32, i32
  }
}

</mosaic_0001>

<llo_original>
// kernel: tpu_custom_call.1
$region0: #{tpu_custom_call.1}
  #allocation0 [shape = 'u32[]', space=smem, size = 0x4, offset = 0x4, fixed_abs, tag = 'smem constant byte address 0x4 - core index']
  #allocation1 [shape = 'u32[144,128]{1,0:T(1,128)}', space=vmem, size = 0x12000, scoped, tag = 'internal scratch']
  %s0 = inlined_call_operand.hbm [shape: f32[2,4,512], index: 0, kind: input, shape index: {}]
  %s1 = inlined_call_operand.hbm [shape: f32[2,16,512], index: 1, kind: input, shape index: {}]
  %s2 = inlined_call_operand.hbm [shape: f32[2,8,512], index: 2, kind: input, shape index: {}]
  %s3 = inlined_call_operand.vmem [shape: f32[8,4], index: 3, kind: input, shape index: {}]
  %s4 = inlined_call_operand.vmem [shape: f32[8,16], index: 4, kind: input, shape index: {}]
  %s5 = inlined_call_operand.vmem [shape: f32[8,8], index: 5, kind: input, shape index: {}]
  %s6 = inlined_call_operand.vmem [shape: f32[8,1], index: 6, kind: input, shape index: {}]
  %s7 = inlined_call_operand.vmem [shape: f32[8,1], index: 7, kind: input, shape index: {}]
  %s8 = inlined_call_operand.hbm [shape: f32[2,8,512], index: 8, kind: output, shape index: {}]
  %s9 = sld [smem:[#allocation0]]
  $region77: #{tpu_custom_call.1} parent=0
    _
  %s11 = ssub.s32 1, %s9
  %s12 = scalar_select 0, %s11, %s9
  $region1: #{tpu_custom_call.1} parent=0
    #allocation2 [shape = 'u8[4096]{0}', space=vmem, size = 0x1000, scoped, tag = 'input window, operand 0']
    #allocation3 [shape = 's32[2]{0}', space=sflag, size = 0x8, scoped, tag = 'scoped memory for tpu_custom_call.1']
    #allocation4 [shape = 's32[2]{0}', space=sflag, size = 0x8, scoped, tag = 'scoped memory for tpu_custom_call.1']
    #allocation5 [shape = 'u8[16384]{0}', space=vmem, size = 0x4000, scoped, tag = 'input window, operand 1']
    #allocation6 [shape = 's32[2]{0}', space=sflag, size = 0x8, scoped, tag = 'scoped memory for tpu_custom_call.1']
    #allocation7 [shape = 'u8[8192]{0}', space=vmem, size = 0x2000, scoped, tag = 'input window, operand 2']
    #allocation8 [shape = 'u8[8192]{0}', space=vmem, size = 0x2000, scoped, tag = 'output window, operand 0']
    %13 = vsyncpa [#allocation3], 0
    %s14 = scalar_lea.sflag [#allocation3], 1
    %15 = vsyncpa %s14, 0
    %16 = vsyncpa [#allocation6], 0
    %s17 = scalar_lea.sflag [#allocation6], 1
    %18 = vsyncpa %s17, 0
    %19 = vsyncpa [#allocation4], 0
    %s20 = scalar_lea.sflag [#allocation4], 1
    %21 = vsyncpa %s20, 0
    loop: start=0, step=1, limit=10
    $region2: #{tpu_custom_call.1} parent=1 // loop_pre_header
      _
    $region3: #{tpu_custom_call.1} parent=1 // loop_header
      %s23 = sphi 0, %s27
      %p24 = scmp.ge.s32.totalorder %s23, 10
      %s30 = sphi 0, %s42
      %s31 = sphi 0, %s38
      %s32 = sphi 0, %s30
      %s33 = sphi 0, %s31
      %s34 = sphi 0, %s32
      %s35 = sphi 0, %s33
      %s47 = sphi 0, %s49
      %s50 = sphi 0, %s47
      %s51 = sphi 0, %s50
      %s67 = sphi 0, %s51
      %s75 = sphi 0, %s77
      %s78 = sphi 0, %s75
      %s79 = sphi 0, %s78
      %s95 = sphi 0, %s79
      %s103 = sphi 0, %s105
      %s106 = sphi 0, %s103
      %s107 = sphi 0, %s106
      %s123 = sphi 0, %s107
      %s127 = sphi 0, %s127
      %s129 = sphi 0, %s127
      %s130 = sphi 0, %s129
      %s144 = sphi 0, %s130
      %s148 = sphi 0, %s148
      %s150 = sphi 0, %s148
      %s151 = sphi 0, %s150
      %s165 = sphi 0, %s151
      %s169 = sphi 0, %s169
      %s171 = sphi 0, %s169
      %s172 = sphi 0, %s171
      %s186 = sphi 0, %s172
      %s190 = sphi 0, %s190
      %s192 = sphi 0, %s190
      %s193 = sphi 0, %s192
      %s207 = sphi 0, %s193
      %s211 = sphi 0, %s211
      %s213 = sphi 0, %s211
      %s214 = sphi 0, %s213
      %s228 = sphi 0, %s214
      %s236 = sphi 0, %s238
      %s239 = sphi 0, %s236
      %s240 = sphi 0, %s239
      %s256 = sphi 0, %s240
    $region4: #{tpu_custom_call.1} parent=1 // loop_header_branch
      %26 = sbr.rel (%p24) target = $region8
    $region5: #{tpu_custom_call.1} parent=1 // loop_body
      %s28 = ssub.s32 %s23, 1
      %s29 = ssub.s32 %s23, 2
      %s36 = sadd.s32 1, %s31
      %p37 = scmp.ge.s32.totalorder %s36, 4
      %s38 = scalar_select %p37, 0, %s36
      %s39 = sadd.s32 1, %s30
      %s40 = scalar_select %p37, %s39, %s30
      %p41 = scmp.ge.s32.totalorder %s40, 2
      %s42 = scalar_select %p41, 0, %s40
      %s43 = ssub.s32 %s30, %s42
      %s44 = ssub.s32 %s31, %s38
      %s45 = sor.u32 %s43, %s44
      %p46 = scmp.eq.s32.totalorder %s45, 0
      %s48 = sadd.s32 %s47, 1
      %s49 = scalar_select %p46, %s47, %s48
      %p52 = pneg %p46
      %p53 = scmp.eq.s32.totalorder %s23, 7
      %p54 = por %p52, %p53
      %p55 = scmp.ne.s32.totalorder %s47, %s50
      %p56 = scmp.eq.s32.totalorder %s23, 0
      %p57 = por %p55, %p56
      %p58 = scmp.ne.s32.totalorder %s47, %s50
      %p59 = scmp.eq.s32.totalorder %s28, 7
      %p60 = por %p58, %p59
      %p61 = scmp.ne.s32.totalorder %s50, %s51
      %p62 = scmp.eq.s32.totalorder %s28, 0
      %p63 = por %p61, %p62
      %p64 = scmp.ne.s32.totalorder %s50, %s51
      %p65 = scmp.eq.s32.totalorder %s29, 7
      %p66 = por %p64, %p65
      %p68 = scmp.ne.s32.totalorder %s51, %s67
      %p69 = scmp.eq.s32.totalorder %s29, 0
      %p70 = por %p68, %p69
      %s71 = ssub.s32 %s30, %s42
      %s72 = ssub.s32 %s31, %s38
      %s73 = sor.u32 %s71, %s72
      %p74 = scmp.eq.s32.totalorder %s73, 0
      %s76 = sadd.s32 %s75, 1
      %s77 = scalar_select %p74, %s75, %s76
      %p80 = pneg %p74
      %p81 = scmp.eq.s32.totalorder %s23, 7
      %p82 = por %p80, %p81
      %p83 = scmp.ne.s32.totalorder %s75, %s78
      %p84 = scmp.eq.s32.totalorder %s23, 0
      %p85 = por %p83, %p84
      %p86 = scmp.ne.s32.totalorder %s75, %s78
      %p87 = scmp.eq.s32.totalorder %s28, 7
      %p88 = por %p86, %p87
      %p89 = scmp.ne.s32.totalorder %s78, %s79
      %p90 = scmp.eq.s32.totalorder %s28, 0
      %p91 = por %p89, %p90
      %p92 = scmp.ne.s32.totalorder %s78, %s79
      %p93 = scmp.eq.s32.totalorder %s29, 7
      %p94 = por %p92, %p93
      %p96 = scmp.ne.s32.totalorder %s79, %s95
      %p97 = scmp.eq.s32.totalorder %s29, 0
      %p98 = por %p96, %p97
      %s99 = ssub.s32 %s30, %s42
      %s100 = ssub.s32 %s31, %s38
      %s101 = sor.u32 %s99, %s100
      %p102 = scmp.eq.s32.totalorder %s101, 0
      %s104 = sadd.s32 %s103, 1
      %s105 = scalar_select %p102, %s103, %s104
      %p108 = pneg %p102
      %p109 = scmp.eq.s32.totalorder %s23, 7
      %p110 = por %p108, %p109
      %p111 = scmp.ne.s32.totalorder %s103, %s106
      %p112 = scmp.eq.s32.totalorder %s23, 0
      %p113 = por %p111, %p112
      %p114 = scmp.ne.s32.totalorder %s103, %s106
      %p115 = scmp.eq.s32.totalorder %s28, 7
      %p116 = por %p114, %p115
      %p117 = scmp.ne.s32.totalorder %s106, %s107
      %p118 = scmp.eq.s32.totalorder %s28, 0
      %p119 = por %p117, %p118
      %p120 = scmp.ne.s32.totalorder %s106, %s107
      %p121 = scmp.eq.s32.totalorder %s29, 7
      %p122 = por %p120, %p121
      %p124 = scmp.ne.s32.totalorder %s107, %s123
      %p125 = scmp.eq.s32.totalorder %s29, 0
      %p126 = por %p124, %p125
      %s128 = sadd.s32 %s127, 1
      %p131 = scmp.eq.s32.totalorder %s23, 7
      %p132 = scmp.ne.s32.totalorder %s127, %s129
      %p133 = scmp.eq.s32.totalorder %s23, 0
      %p134 = por %p132, %p133
      %p135 = scmp.ne.s32.totalorder %s127, %s129
      %p136 = scmp.eq.s32.totalorder %s28, 7
      %p137 = por %p135, %p136
      %p138 = scmp.ne.s32.totalorder %s129, %s130
      %p139 = scmp.eq.s32.totalorder %s28, 0
      %p140 = por %p138, %p139
      %p141 = scmp.ne.s32.totalorder %s129, %s130
      %p142 = scmp.eq.s32.totalorder %s29, 7
      %p143 = por %p141, %p142
      %p145 = scmp.ne.s32.totalorder %s130, %s144
      %p146 = scmp.eq.s32.totalorder %s29, 0
      %p147 = por %p145, %p146
      %s149 = sadd.s32 %s148, 1
      %p152 = scmp.eq.s32.totalorder %s23, 7
      %p153 = scmp.ne.s32.totalorder %s148, %s150
      %p154 = scmp.eq.s32.totalorder %s23, 0
      %p155 = por %p153, %p154
      %p156 = scmp.ne.s32.totalorder %s148, %s150
      %p157 = scmp.eq.s32.totalorder %s28, 7
      %p158 = por %p156, %p157
      %p159 = scmp.ne.s32.totalorder %s150, %s151
      %p160 = scmp.eq.s32.totalorder %s28, 0
      %p161 = por %p159, %p160
      %p162 = scmp.ne.s32.totalorder %s150, %s151
      %p163 = scmp.eq.s32.totalorder %s29, 7
      %p164 = por %p162, %p163
      %p166 = scmp.ne.s32.totalorder %s151, %s165
      %p167 = scmp.eq.s32.totalorder %s29, 0
      %p168 = por %p166, %p167
      %s170 = sadd.s32 %s169, 1
      %p173 = scmp.eq.s32.totalorder %s23, 7
      %p174 = scmp.ne.s32.totalorder %s169, %s171
      %p175 = scmp.eq.s32.totalorder %s23, 0
      %p176 = por %p174, %p175
      %p177 = scmp.ne.s32.totalorder %s169, %s171
      %p178 = scmp.eq.s32.totalorder %s28, 7
      %p179 = por %p177, %p178
      %p180 = scmp.ne.s32.totalorder %s171, %s172
      %p181 = scmp.eq.s32.totalorder %s28, 0
      %p182 = por %p180, %p181
      %p183 = scmp.ne.s32.totalorder %s171, %s172
      %p184 = scmp.eq.s32.totalorder %s29, 7
      %p185 = por %p183, %p184
      %p187 = scmp.ne.s32.totalorder %s172, %s186
      %p188 = scmp.eq.s32.totalorder %s29, 0
      %p189 = por %p187, %p188
      %s191 = sadd.s32 %s190, 1
      %p194 = scmp.eq.s32.totalorder %s23, 7
      %p195 = scmp.ne.s32.totalorder %s190, %s192
      %p196 = scmp.eq.s32.totalorder %s23, 0
      %p197 = por %p195, %p196
      %p198 = scmp.ne.s32.totalorder %s190, %s192
      %p199 = scmp.eq.s32.totalorder %s28, 7
      %p200 = por %p198, %p199
      %p201 = scmp.ne.s32.totalorder %s192, %s193
      %p202 = scmp.eq.s32.totalorder %s28, 0
      %p203 = por %p201, %p202
      %p204 = scmp.ne.s32.totalorder %s192, %s193
      %p205 = scmp.eq.s32.totalorder %s29, 7
      %p206 = por %p204, %p205
      %p208 = scmp.ne.s32.totalorder %s193, %s207
      %p209 = scmp.eq.s32.totalorder %s29, 0
      %p210 = por %p208, %p209
      %s212 = sadd.s32 %s211, 1
      %p215 = scmp.eq.s32.totalorder %s23, 7
      %p216 = scmp.ne.s32.totalorder %s211, %s213
      %p217 = scmp.eq.s32.totalorder %s23, 0
      %p218 = por %p216, %p217
      %p219 = scmp.ne.s32.totalorder %s211, %s213
      %p220 = scmp.eq.s32.totalorder %s28, 7
      %p221 = por %p219, %p220
      %p222 = scmp.ne.s32.totalorder %s213, %s214
      %p223 = scmp.eq.s32.totalorder %s28, 0
      %p224 = por %p222, %p223
      %p225 = scmp.ne.s32.totalorder %s213, %s214
      %p226 = scmp.eq.s32.totalorder %s29, 7
      %p227 = por %p225, %p226
      %p229 = scmp.ne.s32.totalorder %s214, %s228
      %p230 = scmp.eq.s32.totalorder %s29, 0
      %p231 = por %p229, %p230
      %s232 = ssub.s32 %s30, %s42
      %s233 = ssub.s32 %s31, %s38
      %s234 = sor.u32 %s232, %s233
      %p235 = scmp.eq.s32.totalorder %s234, 0
      %s237 = sadd.s32 %s236, 1
      %s238 = scalar_select %p235, %s236, %s237
      %p241 = pneg %p235
      %p242 = scmp.eq.s32.totalorder %s23, 7
      %p243 = por %p241, %p242
      %p244 = scmp.ne.s32.totalorder %s236, %s239
      %p245 = scmp.eq.s32.totalorder %s23, 0
      %p246 = por %p244, %p245
      %p247 = scmp.ne.s32.totalorder %s236, %s239
      %p248 = scmp.eq.s32.totalorder %s28, 7
      %p249 = por %p247, %p248
      %p250 = scmp.ne.s32.totalorder %s239, %s240
      %p251 = scmp.eq.s32.totalorder %s28, 0
      %p252 = por %p250, %p251
      %p253 = scmp.ne.s32.totalorder %s239, %s240
      %p254 = scmp.eq.s32.totalorder %s29, 7
      %p255 = por %p253, %p254
      %p257 = scmp.ne.s32.totalorder %s240, %s256
      %p258 = scmp.eq.s32.totalorder %s29, 0
      %p259 = por %p257, %p258
      %p260 = scmp.le.s32.totalorder 1, %s23
      %p261 = scmp.lt.s32.totalorder %s23, 9
      %p262 = pnand %p260, %p261
      %p263 = pneg %p262
      // Predicated region
      $region9: #{tpu_custom_call.1} parent=5 // pred_check
        _
      $region10: #{tpu_custom_call.1} parent=5 // pred_check_branch
        %265 = sbr.rel (%p262) target = $region12
      $region11: #{tpu_custom_call.1} parent=5 // pred_region
        %s266 = ssub.s32 %s23, 1
        // Predicated region
        $region13: #{tpu_custom_call.1} parent=11 // pred_check
          %p267 = pneg %p140
        $region14: #{tpu_custom_call.1} parent=11 // pred_check_branch
          %269 = sbr.rel (%p267) target = $region16
        $region15: #{tpu_custom_call.1} parent=11 // pred_region
          _
        $region16: #{tpu_custom_call.1} parent=11 // pred_fallthru
          _
        // Predicated region
        $region17: #{tpu_custom_call.1} parent=11 // pred_check
          %p270 = pneg %p161
        $region18: #{tpu_custom_call.1} parent=11 // pred_check_branch
          %272 = sbr.rel (%p270) target = $region20
        $region19: #{tpu_custom_call.1} parent=11 // pred_region
          _
        $region20: #{tpu_custom_call.1} parent=11 // pred_fallthru
          _
        // Predicated region
        $region21: #{tpu_custom_call.1} parent=11 // pred_check
          %p273 = pneg %p182
        $region22: #{tpu_custom_call.1} parent=11 // pred_check_branch
          %275 = sbr.rel (%p273) target = $region24
        $region23: #{tpu_custom_call.1} parent=11 // pred_region
          _
        $region24: #{tpu_custom_call.1} parent=11 // pred_fallthru
          _
        // Predicated region
        $region25: #{tpu_custom_call.1} parent=11 // pred_check
          %p276 = pneg %p203
        $region26: #{tpu_custom_call.1} parent=11 // pred_check_branch
          %278 = sbr.rel (%p276) target = $region28
        $region27: #{tpu_custom_call.1} parent=11 // pred_region
          _
        $region28: #{tpu_custom_call.1} parent=11 // pred_fallthru
          _
        // Predicated region
        $region29: #{tpu_custom_call.1} parent=11 // pred_check
          %p279 = pneg %p224
        $region30: #{tpu_custom_call.1} parent=11 // pred_check_branch
          %281 = sbr.rel (%p279) target = $region32
        $region31: #{tpu_custom_call.1} parent=11 // pred_region
          _
        $region32: #{tpu_custom_call.1} parent=11 // pred_fallthru
          _
      $region12: #{tpu_custom_call.1} parent=5 // pred_fallthru
        _
      %p282 = scmp.lt.s32.totalorder %s23, 8
      // Predicated region
      $region33: #{tpu_custom_call.1} parent=5 // pred_check
        %p283 = pneg %p282
      $region34: #{tpu_custom_call.1} parent=5 // pred_check_branch
        %285 = sbr.rel (%p283) target = $region36
      $region35: #{tpu_custom_call.1} parent=5 // pred_region
        // Predicated region
        $region37: #{tpu_custom_call.1} parent=35 // pred_check
          %p286 = pneg %p57
        $region38: #{tpu_custom_call.1} parent=35 // pred_check_branch
          %288 = sbr.rel (%p286) target = $region40
        $region39: #{tpu_custom_call.1} parent=35 // pred_region
          %s289 = sand.u32 %s47, 1
          %s290 = scalar_lea.sflag [#allocation3], %s289
          %s291 = sand.u32 %s47, 1
          %s292 = smul.addr %s291, 4
          %s293 = scalar_lea.vmem [#allocation2], %s292
          %s295 = ssub.s32 64, 64
          %296 = vsyncadd %s290, %s295
          %s297 = smul.addr %s30, 4
          %s298 = sadd.s32 %s31, %s297
          %s299 = smul.addr %s298, 64
          %s300 = scalar_lea.hbm %s0, %s299
          %s302 = sshll.u32 %s293, 4
          %s303 = int_to_ptr.vmem [resolvable:$true] %s302
          %305 = dma.hbm_to_vmem [thread:$0]  %s300, 64, %s303, %s290
        $region40: #{tpu_custom_call.1} parent=35 // pred_fallthru
          _
        // Predicated region
        $region41: #{tpu_custom_call.1} parent=35 // pred_check
          %p306 = pneg %p85
        $region42: #{tpu_custom_call.1} parent=35 // pred_check_branch
          %308 = sbr.rel (%p306) target = $region44
        $region43: #{tpu_custom_call.1} parent=35 // pred_region
          %s309 = sand.u32 %s23, 1
          %s310 = scalar_lea.sflag [#allocation6], %s309
          %s311 = sand.u32 %s75, 1
          %s312 = smul.addr %s311, 16
          %s313 = scalar_lea.vmem [#allocation5], %s312
          %s315 = ssub.s32 256, 256
          %316 = vsyncadd %s310, %s315
          %s317 = smul.addr %s30, 8
          %s318 = sadd.s32 %s31, %s317
          %s319 = smul.addr %s318, 128
          %s320 = scalar_lea.hbm %s1, %s319
          %s321 = sshll.u32 %s313, 4
          %s322 = int_to_ptr.vmem [resolvable:$true] %s321
          %327 = dma.hbm_to_vmem [thread:$0]  %s320, 256, %s322, %s310, 512, 128, 8
        $region44: #{tpu_custom_call.1} parent=35 // pred_fallthru
          _
        // Predicated region
        $region45: #{tpu_custom_call.1} parent=35 // pred_check
          %p328 = pneg %p113
        $region46: #{tpu_custom_call.1} parent=35 // pred_check_branch
          %330 = sbr.rel (%p328) target = $region48
        $region47: #{tpu_custom_call.1} parent=35 // pred_region
          %s331 = sand.u32 %s23, 1
          %s332 = scalar_lea.sflag [#allocation6], %s331
          %s333 = sand.u32 %s103, 1
          %s334 = smul.addr %s333, 8
          %s335 = scalar_lea.vmem [#allocation7], %s334
          %s337 = ssub.s32 128, 128
          %338 = vsyncadd %s332, %s337
          %s339 = smul.addr %s30, 4
          %s340 = sadd.s32 %s31, %s339
          %s341 = smul.addr %s340, 128
          %s342 = scalar_lea.hbm %s2, %s341
          %s344 = sshll.u32 %s335, 4
          %s345 = int_to_ptr.vmem [resolvable:$true] %s344
          %347 = dma.hbm_to_vmem [thread:$0]  %s342, 128, %s345, %s332
        $region48: #{tpu_custom_call.1} parent=35 // pred_fallthru
          _
      $region36: #{tpu_custom_call.1} parent=5 // pred_fallthru
        _
      %p348 = scmp.le.s32.totalorder 1, %s23
      %p349 = scmp.lt.s32.totalorder %s23, 9
      %p350 = pnand %p348, %p349
      %p351 = pneg %p350
      // Predicated region
      $region49: #{tpu_custom_call.1} parent=5 // pred_check
        _
      $region50: #{tpu_custom_call.1} parent=5 // pred_check_branch
        %353 = sbr.rel (%p350) target = $region52
      $region51: #{tpu_custom_call.1} parent=5 // pred_region
        %s354 = ssub.s32 %s23, 1
        %s355 = sand.u32 %s50, 1
        %s356 = scalar_lea.sflag [#allocation3], %s355
        %s357 = sand.u32 %s50, 1
        %s358 = smul.addr %s357, 4
        %s359 = scalar_lea.vmem [#allocation2], %s358
        // Predicated region
        $region53: #{tpu_custom_call.1} parent=51 // pred_check
          %p360 = pneg %p63
        $region54: #{tpu_custom_call.1} parent=51 // pred_check_branch
          %362 = sbr.rel (%p360) target = $region56
        $region55: #{tpu_custom_call.1} parent=51 // pred_region
          %363 = dma.done %s356, 64
        $region56: #{tpu_custom_call.1} parent=51 // pred_fallthru
          _
        %s364 = sand.u32 %s28, 1
        %s365 = scalar_lea.sflag [#allocation6], %s364
        %s366 = sand.u32 %s78, 1
        %s367 = smul.addr %s366, 16
        %s368 = scalar_lea.vmem [#allocation5], %s367
        // Predicated region
        $region57: #{tpu_custom_call.1} parent=51 // pred_check
          %p369 = pneg %p91
        $region58: #{tpu_custom_call.1} parent=51 // pred_check_branch
          %371 = sbr.rel (%p369) target = $region60
        $region59: #{tpu_custom_call.1} parent=51 // pred_region
          %372 = dma.done %s365, 256
        $region60: #{tpu_custom_call.1} parent=51 // pred_fallthru
          _
        %s373 = sand.u32 %s28, 1
        %s374 = scalar_lea.sflag [#allocation6], %s373
        %s375 = sand.u32 %s106, 1
        %s376 = smul.addr %s375, 8
        %s377 = scalar_lea.vmem [#allocation7], %s376
        // Predicated region
        $region61: #{tpu_custom_call.1} parent=51 // pred_check
          %p378 = pneg %p119
        $region62: #{tpu_custom_call.1} parent=51 // pred_check_branch
          %380 = sbr.rel (%p378) target = $region64
        $region63: #{tpu_custom_call.1} parent=51 // pred_region
          %381 = dma.done %s374, 128
        $region64: #{tpu_custom_call.1} parent=51 // pred_fallthru
          _
        %s382 = sand.u32 %s50, 1
        %s383 = scalar_lea.sflag [#allocation3], %s382
        %s384 = sand.u32 %s50, 1
        %s385 = smul.addr %s384, 4
        %s386 = scalar_lea.vmem [#allocation2], %s385
        %p387 = pneg %p63
        %p388 = pneg %p60
        %s389 = sand.u32 %s28, 1
        %s390 = scalar_lea.sflag [#allocation6], %s389
        %s391 = sand.u32 %s78, 1
        %s392 = smul.addr %s391, 16
        %s393 = scalar_lea.vmem [#allocation5], %s392
        %p394 = pneg %p91
        %p395 = pneg %p88
        %s396 = sand.u32 %s28, 1
        %s397 = scalar_lea.sflag [#allocation6], %s396
        %s398 = sand.u32 %s106, 1
        %s399 = smul.addr %s398, 8
        %s400 = scalar_lea.vmem [#allocation7], %s399
        %p401 = pneg %p119
        %p402 = pneg %p116
        %p403 = pneg %p140
        %p404 = pneg %p137
        %p405 = pneg %p161
        %p406 = pneg %p158
        %p407 = pneg %p182
        %p408 = pneg %p179
        %p409 = pneg %p203
        %p410 = pneg %p200
        %p411 = pneg %p224
        %p412 = pneg %p221
        %p413 = pneg %p252
        %p414 = pneg %p249
        %s415 = sand.u32 %s239, 1
        %s416 = scalar_lea.sflag [#allocation4], %s415
        %s417 = sand.u32 %s239, 1
        %s418 = smul.addr %s417, 8
        %s419 = scalar_lea.vmem [#allocation8], %s418
        %v420 = vld [vmem:[%s359] sm:$0xf]
        %v421 = vld [vmem:[%s368] sm:$0xff]
        %v422 = vld [vmem:[%s368 + $0x8] sm:$0xff]
        %v423 = vld [vmem:[%s3] sm:$0xff]
        %v424 = vld [vmem:[%s4] sm:$0xff]
        %vm425 = vcmask 130048
        %v427 = vsel %vm425, %v424, 0
        %429 = vmatprep.subr.mxu0 0.0
        %430 = vmatpush1.msra.mxu0 %v421
        %431 = vmatprep.subr.mxu0 0.0
        %432 = vmatpush1.msra.mxu0 %v422
        %433 = vmatprep.subr.mxu0 0.0
        %434 = vmatpush1.msra.mxu0 0.0
        %435 = vmatprep.subr.mxu0 0.0
        %436 = vmatpush1.msra.mxu0 0.0
        %437 = vmatprep.subr.mxu0 0.0
        %438 = vmatpush1.msra.mxu0 0.0
        %439 = vmatprep.subr.mxu0 0.0
        %440 = vmatpush1.msra.mxu0 0.0
        %441 = vmatprep.subr.mxu0 0.0
        %442 = vmatpush1.msra.mxu0 0.0
        %443 = vmatprep.subr.mxu0 0.0
        %444 = vmatpush1.msra.mxu0 0.0
        %445 = vmatprep.subr.mxu0 0.0
        %446 = vmatpush1.msra.mxu0 0.0
        %447 = vmatprep.subr.mxu0 0.0
        %448 = vmatpush1.msra.mxu0 0.0
        %449 = vmatprep.subr.mxu0 0.0
        %450 = vmatpush1.msra.mxu0 0.0
        %451 = vmatprep.subr.mxu0 0.0
        %452 = vmatpush1.msra.mxu0 0.0
        %453 = vmatprep.subr.mxu0 0.0
        %454 = vmatpush1.msra.mxu0 0.0
        %455 = vmatprep.subr.mxu0 0.0
        %456 = vmatpush1.msra.mxu0 0.0
        %457 = vmatprep.subr.mxu0 0.0
        %458 = vmatpush1.msra.mxu0 0.0
        %459 = vmatprep.subr.mxu0 0.0
        %460 = vmatpush1.msra.mxu0 0.0
        %461 = vmatprep.subr.mxu0 0.0
        %462 = vmatpush1.msra.mxu0 0.0
        %463 = vmatprep.subr.mxu0 0.0
        %464 = vmatpush1.msra.mxu0 0.0
        %465 = vmatprep.subr.mxu0 0.0
        %466 = vmatpush1.msra.mxu0 0.0
        %467 = vmatprep.subr.mxu0 0.0
        %468 = vmatpush1.msra.mxu0 0.0
        %469 = vmatprep.subr.mxu0 0.0
        %470 = vmatpush1.msra.mxu0 0.0
        %471 = vmatprep.subr.mxu0 0.0
        %472 = vmatpush1.msra.mxu0 0.0
        %473 = vmatprep.subr.mxu0 0.0
        %474 = vmatpush1.msra.mxu0 0.0
        %475 = vmatprep.subr.mxu0 0.0
        %476 = vmatpush1.msra.mxu0 0.0
        %477 = vmatprep.subr.mxu0 0.0
        %478 = vmatpush1.msra.mxu0 0.0
        %479 = vmatprep.subr.mxu0 0.0
        %480 = vmatpush1.msra.mxu0 0.0
        %481 = vmatprep.subr.mxu0 0.0
        %482 = vmatpush1.msra.mxu0 0.0
        %483 = vmatprep.subr.mxu0 0.0
        %484 = vmatpush1.msra.mxu0 0.0
        %485 = vmatprep.subr.mxu0 0.0
        %486 = vmatpush1.msra.mxu0 0.0
        %487 = vmatprep.subr.mxu0 0.0
        %488 = vmatpush1.msra.mxu0 0.0
        %489 = vmatprep.subr.mxu0 0.0
        %490 = vmatpush1.msra.mxu0 0.0
        %491 = vmatprep.subr.mxu0 0.0
        %492 = vmatpush1.msra.mxu0 0.0
        %493 = vmatprep.mubr.f32.mxu0 0.0
        %494 = vmatmul.mubr.f32.gmra.mrb[0].mxu0 %v427
        %v495 = vpop.f32.mrb[0].mxu0
        %v496 = vadd.f32 0.0, %v495
        %v497 = vpop.f32.mrb[0].mxu0
        %498 = vdwg.mxu0
        %vm499 = vcmask 31744
        %v501 = vsel %vm499, %v423, 0
        %vm503 = vcmask 1043456
        %v505 = vsel %vm503, %v420, 0
        %507 = vmatprep.subr.mxu0 0.0
        %508 = vmatpush1.msra.mxu0 %v505
        %509 = vmatprep.subr.mxu0 0.0
        %510 = vmatpush1.msra.mxu0 0.0
        %511 = vmatprep.subr.mxu0 0.0
        %512 = vmatpush1.msra.mxu0 0.0
        %513 = vmatprep.subr.mxu0 0.0
        %514 = vmatpush1.msra.mxu0 0.0
        %515 = vmatprep.subr.mxu0 0.0
        %516 = vmatpush1.msra.mxu0 0.0
        %517 = vmatprep.subr.mxu0 0.0
        %518 = vmatpush1.msra.mxu0 0.0
        %519 = vmatprep.subr.mxu0 0.0
        %520 = vmatpush1.msra.mxu0 0.0
        %521 = vmatprep.subr.mxu0 0.0
        %522 = vmatpush1.msra.mxu0 0.0
        %523 = vmatprep.subr.mxu0 0.0
        %524 = vmatpush1.msra.mxu0 0.0
        %525 = vmatprep.subr.mxu0 0.0
        %526 = vmatpush1.msra.mxu0 0.0
        %527 = vmatprep.subr.mxu0 0.0
        %528 = vmatpush1.msra.mxu0 0.0
        %529 = vmatprep.subr.mxu0 0.0
        %530 = vmatpush1.msra.mxu0 0.0
        %531 = vmatprep.subr.mxu0 0.0
        %532 = vmatpush1.msra.mxu0 0.0
        %533 = vmatprep.subr.mxu0 0.0
        %534 = vmatpush1.msra.mxu0 0.0
        %535 = vmatprep.subr.mxu0 0.0
        %536 = vmatpush1.msra.mxu0 0.0
        %537 = vmatprep.subr.mxu0 0.0
        %538 = vmatpush1.msra.mxu0 0.0
        %539 = vmatprep.subr.mxu0 0.0
        %540 = vmatpush1.msra.mxu0 0.0
        %541 = vmatprep.subr.mxu0 0.0
        %542 = vmatpush1.msra.mxu0 0.0
        %543 = vmatprep.subr.mxu0 0.0
        %544 = vmatpush1.msra.mxu0 0.0
        %545 = vmatprep.subr.mxu0 0.0
        %546 = vmatpush1.msra.mxu0 0.0
        %547 = vmatprep.subr.mxu0 0.0
        %548 = vmatpush1.msra.mxu0 0.0
        %549 = vmatprep.subr.mxu0 0.0
        %550 = vmatpush1.msra.mxu0 0.0
        %551 = vmatprep.subr.mxu0 0.0
        %552 = vmatpush1.msra.mxu0 0.0
        %553 = vmatprep.subr.mxu0 0.0
        %554 = vmatpush1.msra.mxu0 0.0
        %555 = vmatprep.subr.mxu0 0.0
        %556 = vmatpush1.msra.mxu0 0.0
        %557 = vmatprep.subr.mxu0 0.0
        %558 = vmatpush1.msra.mxu0 0.0
        %559 = vmatprep.subr.mxu0 0.0
        %560 = vmatpush1.msra.mxu0 0.0
        %561 = vmatprep.subr.mxu0 0.0
        %562 = vmatpush1.msra.mxu0 0.0
        %563 = vmatprep.subr.mxu0 0.0
        %564 = vmatpush1.msra.mxu0 0.0
        %565 = vmatprep.subr.mxu0 0.0
        %566 = vmatpush1.msra.mxu0 0.0
        %567 = vmatprep.subr.mxu0 0.0
        %568 = vmatpush1.msra.mxu0 0.0
        %569 = vmatprep.subr.mxu0 0.0
        %570 = vmatpush1.msra.mxu0 0.0
        %571 = vmatprep.mubr.f32.mxu0 0.0
        %572 = vmatmul.mubr.f32.gmra.mrb[0].mxu0 %v501
        %v573 = vpop.f32.mrb[0].mxu0
        %v574 = vadd.f32 %v496, %v573
        %v575 = vpop.f32.mrb[0].mxu0
        %576 = vdwg.mxu0
        %v577 = vld [vmem:[%s6] sm:$0xff]
        %579 = vset.pattern.permute.xlu0 0
        %580 = vperm.xlu0 %579, %v577
        %v581 = vpop.permute.xlu0 %580
        %v583 = vadd.f32 %v574, %v581
        %v584 = vxor.u32 %v583, 2147483648
        %v585 = vmul.f32 %v584, 1.442695
        %v586 = vpow.pop %v585
        %v587 = vadd.f32 %v586, 1.0
        %v588 = vrcp.pop %v587
        %v589 = vmul.f32 1.0, %v588
        %v590 = vld [vmem:[%s377] sm:$0xff]
        %v591 = vld [vmem:[%s5] sm:$0xff]
        %v592 = vld [vmem:[%s7] sm:$0xff]
        %594 = vset.pattern.permute.xlu0 0
        %595 = vperm.xlu0 %594, %v592
        %v596 = vpop.permute.xlu0 %595
        %vm598 = vcmask 64512
        %v600 = vsel %vm598, %v591, 0
        %602 = vmatprep.subr.mxu0 0.0
        %603 = vmatpush1.msra.mxu0 %v590
        %604 = vmatprep.subr.mxu0 0.0
        %605 = vmatpush1.msra.mxu0 0.0
        %606 = vmatprep.subr.mxu0 0.0
        %607 = vmatpush1.msra.mxu0 0.0
        %608 = vmatprep.subr.mxu0 0.0
        %609 = vmatpush1.msra.mxu0 0.0
        %610 = vmatprep.subr.mxu0 0.0
        %611 = vmatpush1.msra.mxu0 0.0
        %612 = vmatprep.subr.mxu0 0.0
        %613 = vmatpush1.msra.mxu0 0.0
        %614 = vmatprep.subr.mxu0 0.0
        %615 = vmatpush1.msra.mxu0 0.0
        %616 = vmatprep.subr.mxu0 0.0
        %617 = vmatpush1.msra.mxu0 0.0
        %618 = vmatprep.subr.mxu0 0.0
        %619 = vmatpush1.msra.mxu0 0.0
        %620 = vmatprep.subr.mxu0 0.0
        %621 = vmatpush1.msra.mxu0 0.0
        %622 = vmatprep.subr.mxu0 0.0
        %623 = vmatpush1.msra.mxu0 0.0
        %624 = vmatprep.subr.mxu0 0.0
        %625 = vmatpush1.msra.mxu0 0.0
        %626 = vmatprep.subr.mxu0 0.0
        %627 = vmatpush1.msra.mxu0 0.0
        %628 = vmatprep.subr.mxu0 0.0
        %629 = vmatpush1.msra.mxu0 0.0
        %630 = vmatprep.subr.mxu0 0.0
        %631 = vmatpush1.msra.mxu0 0.0
        %632 = vmatprep.subr.mxu0 0.0
        %633 = vmatpush1.msra.mxu0 0.0
        %634 = vmatprep.subr.mxu0 0.0
        %635 = vmatpush1.msra.mxu0 0.0
        %636 = vmatprep.subr.mxu0 0.0
        %637 = vmatpush1.msra.mxu0 0.0
        %638 = vmatprep.subr.mxu0 0.0
        %639 = vmatpush1.msra.mxu0 0.0
        %640 = vmatprep.subr.mxu0 0.0
        %641 = vmatpush1.msra.mxu0 0.0
        %642 = vmatprep.subr.mxu0 0.0
        %643 = vmatpush1.msra.mxu0 0.0
        %644 = vmatprep.subr.mxu0 0.0
        %645 = vmatpush1.msra.mxu0 0.0
        %646 = vmatprep.subr.mxu0 0.0
        %647 = vmatpush1.msra.mxu0 0.0
        %648 = vmatprep.subr.mxu0 0.0
        %649 = vmatpush1.msra.mxu0 0.0
        %650 = vmatprep.subr.mxu0 0.0
        %651 = vmatpush1.msra.mxu0 0.0
        %652 = vmatprep.subr.mxu0 0.0
        %653 = vmatpush1.msra.mxu0 0.0
        %654 = vmatprep.subr.mxu0 0.0
        %655 = vmatpush1.msra.mxu0 0.0
        %656 = vmatprep.subr.mxu0 0.0
        %657 = vmatpush1.msra.mxu0 0.0
        %658 = vmatprep.subr.mxu0 0.0
        %659 = vmatpush1.msra.mxu0 0.0
        %660 = vmatprep.subr.mxu0 0.0
        %661 = vmatpush1.msra.mxu0 0.0
        %662 = vmatprep.subr.mxu0 0.0
        %663 = vmatpush1.msra.mxu0 0.0
        %664 = vmatprep.subr.mxu0 0.0
        %665 = vmatpush1.msra.mxu0 0.0
        %666 = vmatprep.mubr.f32.mxu0 0.0
        %667 = vmatmul.mubr.f32.gmra.mrb[0].mxu0 %v600
        %v668 = vpop.f32.mrb[0].mxu0
        %v669 = vadd.f32 %v596, %v668
        %v670 = vpop.f32.mrb[0].mxu0
        %671 = vdwg.mxu0
        %v672 = vmul.f32 %v669, %v589
        %v673 = vadd.f32 %v590, %v672
        %674 = vst [vmem:[%s419] sm:$0xff] %v673
        %s675 = sand.u32 %s239, 1
        %s676 = scalar_lea.sflag [#allocation4], %s675
        %s677 = sand.u32 %s239, 1
        %s678 = smul.addr %s677, 8
        %s679 = scalar_lea.vmem [#allocation8], %s678
        // Predicated region
        $region65: #{tpu_custom_call.1} parent=51 // pred_check
          %p680 = pneg %p249
        $region66: #{tpu_custom_call.1} parent=51 // pred_check_branch
          %682 = sbr.rel (%p680) target = $region68
        $region67: #{tpu_custom_call.1} parent=51 // pred_region
          %s684 = ssub.s32 128, 128
          %685 = vsyncadd %s676, %s684
          %s686 = smul.addr %s32, 4
          %s687 = sadd.s32 %s33, %s686
          %s688 = smul.addr %s687, 128
          %s689 = scalar_lea.hbm %s8, %s688
          %s691 = sshll.u32 %s679, 4
          %s692 = int_to_ptr.vmem [resolvable:$true] %s691
          %694 = dma.vmem_to_hbm [thread:$0]  %s692, 128, %s689, %s676
        $region68: #{tpu_custom_call.1} parent=51 // pred_fallthru
          _
      $region52: #{tpu_custom_call.1} parent=5 // pred_fallthru
        _
      %p695 = scmp.le.s32.totalorder 2, %s23
      // Predicated region
      $region69: #{tpu_custom_call.1} parent=5 // pred_check
        %p696 = pneg %p695
      $region70: #{tpu_custom_call.1} parent=5 // pred_check_branch
        %698 = sbr.rel (%p696) target = $region72
      $region71: #{tpu_custom_call.1} parent=5 // pred_region
        %s699 = ssub.s32 %s23, 2
        // Predicated region
        $region73: #{tpu_custom_call.1} parent=71 // pred_check
          %p700 = pneg %p255
        $region74: #{tpu_custom_call.1} parent=71 // pred_check_branch
          %702 = sbr.rel (%p700) target = $region76
        $region75: #{tpu_custom_call.1} parent=71 // pred_region
          %s703 = sand.u32 %s240, 1
          %s704 = scalar_lea.sflag [#allocation4], %s703
          %s705 = sand.u32 %s240, 1
          %s706 = smul.addr %s705, 8
          %s707 = scalar_lea.vmem [#allocation8], %s706
          %708 = dma.done %s704, 128
        $region76: #{tpu_custom_call.1} parent=71 // pred_fallthru
          _
      $region72: #{tpu_custom_call.1} parent=5 // pred_fallthru
        _
    $region6: #{tpu_custom_call.1} parent=1 // loop_footer
      %s27 = sadd.s32 1, %s23
    $region7: #{tpu_custom_call.1} parent=1 // loop_footer_branch
      %22 = sbr.rel target = $region3
    $region8: #{tpu_custom_call.1} parent=1 // loop_exit
      _
    %709 = vsyncpa [#allocation3], 1
    %s710 = scalar_lea.sflag [#allocation3], 1
    %711 = vsyncpa %s710, 1
    %712 = vsyncpa [#allocation6], 1
    %s713 = scalar_lea.sflag [#allocation6], 1
    %714 = vsyncpa %s713, 1
    %715 = vsyncpa [#allocation4], 1
    %s716 = scalar_lea.sflag [#allocation4], 1
    %717 = vsyncpa %s716, 1

</llo_original>
